<compile_context>
chip_gen: v7x
topology: tpu7x:2x2x1
jax: 0.10.0
libtpu: 0.0.40
codegen_flags: <defaults>
</compile_context>

<pallas_src>
import functools

import jax
import jax.numpy as jnp
from jax.experimental import pallas as pl
from jax.experimental.pallas import tpu as pltpu


# --------------------------------------------------------------------------
# Kernels
# --------------------------------------------------------------------------
def se2d_kernel(x_ref, w1_ref, b1_ref, w2_ref, b2_ref, o_ref, *, hw_true):
    """Single-phase SE: whole image block resident. x_ref: (Bb, C, HWp)."""
    # squeeze: f32-accumulated spatial mean (lane reduction) -> (Bb, C)
    # (re-read x_ref in each phase; no full-tile temporary kept live)
    x_se = jnp.sum(x_ref[...], axis=-1, dtype=jnp.float32) * (1.0 / hw_true)

    # conv_reduce (1x1 conv == channel matmul) + bias, then SiLU
    h = jnp.dot(x_se, w1_ref[...], preferred_element_type=jnp.float32) + b1_ref[...]
    h = h * jax.nn.sigmoid(h)                               # (Bb, Cr)

    # conv_expand + bias, then sigmoid gate
    g = jnp.dot(h, w2_ref[...], preferred_element_type=jnp.float32) + b2_ref[...]
    g = jax.nn.sigmoid(g)                                   # (Bb, C), f32

    # excite: f32 broadcast-multiply along the lane (spatial) axis
    o_ref[...] = (x_ref[...].astype(jnp.float32) * g[:, :, None]).astype(o_ref.dtype)


def se2d_gate_kernel(x_ref, w1_ref, b1_ref, w2_ref, b2_ref, g_ref, acc_ref, *, hw_true):
    """Two-phase / phase A: accumulate spatial sums over an 'arbitrary' HW grid
    axis, compute the sigmoid gate on the last step.  g_ref: (Bb, C, 1) f32."""
    h_id = pl.program_id(1)

    @pl.when(h_id == 0)
    def _init():
        acc_ref[...] = jnp.zeros_like(acc_ref)

    acc_ref[...] += jnp.sum(x_ref[...], axis=-1, dtype=jnp.float32)

    @pl.when(h_id == pl.num_programs(1) - 1)
    def _finalize():
        x_se = acc_ref[...] * (1.0 / hw_true)
        h = jnp.dot(x_se, w1_ref[...], preferred_element_type=jnp.float32) + b1_ref[...]
        h = h * jax.nn.sigmoid(h)
        g = jnp.dot(h, w2_ref[...], preferred_element_type=jnp.float32) + b2_ref[...]
        g_ref[...] = jax.nn.sigmoid(g)[:, :, None]


def se2d_apply_kernel(x_ref, g_ref, o_ref):
    """Two-phase / phase B: broadcast-multiply the gate along spatial."""
    o_ref[...] = (x_ref[...].astype(jnp.float32) * g_ref[...]).astype(o_ref.dtype)


# --------------------------------------------------------------------------
# Block / budget selection helpers
# --------------------------------------------------------------------------
def _vmem_limit_bytes(requested=None):
    """Generation-aware scoped-VMEM budget (v7x has 64 MiB physical)."""
    phys = 128 * 1024 * 1024
    try:
        info = pltpu.get_tpu_info()
        phys = int(getattr(info, "vmem_capacity_bytes", phys) or phys)
    except Exception:
        pass
    cap = (phys * 3) // 4                       # leave headroom below physical
    default = min(64 * 1024 * 1024, cap)        # 64 MiB on v5e/v6e, 48 MiB on v7x
    return default if requested is None else min(int(requested), cap)


def _cdiv(a, b):
    return -(-a // b)


def _pick_block_b(B, bytes_per_img, vmem_limit):
    """Batch block size: ~2 MiB blocks, fit double-buffered in+out, >=8 steps."""
    target = 2 * 1024 * 1024
    cap = max(1, (vmem_limit // 4) // max(1, bytes_per_img))   # 2 in + 2 out buffers
    bb = max(1, min(B, cap, max(1, target // max(1, bytes_per_img))))
    if B * bytes_per_img > (1 << 20):           # not a tiny problem:
        while bb > 1 and _cdiv(B, bb) < 8:      # want >=8 steps (>=4 per TC on v7x)
            bb = max(1, bb // 2)
    return bb


def _pick_two_phase_tiles(B, C, HW_pad, itemsize, vmem_limit):
    """Tile sizes for the reduce-then-scale path (one image > VMEM budget)."""
    target = 2 * 1024 * 1024
    row_bytes = C * itemsize
    hw_t = (max(1, target // max(1, row_bytes)) // 128) * 128
    hw_t = int(max(128, min(HW_pad, hw_t)))
    blk_bytes = C * hw_t * itemsize
    cap = max(1, (vmem_limit // 6) // max(1, blk_bytes))
    bb = max(1, min(B, cap, max(1, target // max(1, blk_bytes))))
    return bb, hw_t


# --------------------------------------------------------------------------
# Wrapper
# --------------------------------------------------------------------------
def se2d_pallas(x_nchw, w1, b1, w2, b2, *, vmem_limit_bytes=None,
                two_phase=None, block_b=None, block_hw=None):
    """x_nchw: (B, C, H, W). w1: (C, Cr), b1: (1, Cr), w2: (Cr, C), b2: (1, C)."""
    B, C, H, W = x_nchw.shape
    Cr = w1.shape[1]
    HW = H * W
    itemsize = x_nchw.dtype.itemsize
    vmem_limit = _vmem_limit_bytes(vmem_limit_bytes)

    # Lane-dense spatial axis: pad H*W up to a multiple of 128 (mean uses true HW).
    HW_pad = _cdiv(HW, 128) * 128
    bytes_per_img = C * HW_pad * itemsize

    if two_phase is None:
        # Single-phase needs a whole image (double-buffered in + out) in VMEM
        # with headroom; otherwise use the reduce-then-scale path.
        two_phase = 4 * bytes_per_img > vmem_limit // 2

    x = x_nchw.reshape(B, C, HW)

    # ---------------------------- single-phase ----------------------------
    if not two_phase:
        if HW_pad != HW:
            x = jnp.pad(x, ((0, 0), (0, 0), (0, HW_pad - HW)))
        bb = block_b if block_b is not None else _pick_block_b(B, bytes_per_img, vmem_limit)
        grid = (_cdiv(B, bb),)

        cost = pl.CostEstimate(
            flops=3 * B * C * HW_pad + 4 * B * C * Cr,
            transcendentals=B * (C + Cr),
            bytes_accessed=2 * B * C * HW_pad * itemsize + (2 * C * Cr + C + Cr) * 4,
        )

        out = pl.pallas_call(
            functools.partial(se2d_kernel, hw_true=float(HW)),
            out_shape=jax.ShapeDtypeStruct((B, C, HW_pad), x.dtype),
            grid=grid,
            in_specs=[
                pl.BlockSpec((bb, C, HW_pad), lambda b: (b, 0, 0)),   # x block
                pl.BlockSpec((C, Cr), lambda b: (0, 0)),              # w1 (resident)
                pl.BlockSpec((1, Cr), lambda b: (0, 0)),              # b1
                pl.BlockSpec((Cr, C), lambda b: (0, 0)),              # w2
                pl.BlockSpec((1, C), lambda b: (0, 0)),               # b2
            ],
            out_specs=pl.BlockSpec((bb, C, HW_pad), lambda b: (b, 0, 0)),
            compiler_params=pltpu.CompilerParams(
                dimension_semantics=("parallel",),
                vmem_limit_bytes=vmem_limit,
            ),
            cost_estimate=cost,
        )(x, w1, b1, w2, b2)

        if HW_pad != HW:
            out = out[:, :, :HW]
        return out.reshape(B, C, H, W)

    # ------------------- two-phase (reduce-then-scale) --------------------
    bb, hw_t = _pick_two_phase_tiles(B, C, HW_pad, itemsize, vmem_limit)
    if block_b is not None:
        bb = block_b
    if block_hw is not None:
        hw_t = block_hw
    # Pad spatial to a multiple of the tile (zero pad => sums unaffected).
    HW_tp = _cdiv(HW_pad, hw_t) * hw_t
    if HW_tp != HW:
        x = jnp.pad(x, ((0, 0), (0, 0), (0, HW_tp - HW)))
    grid = (_cdiv(B, bb), HW_tp // hw_t)

    gate_cost = pl.CostEstimate(
        flops=B * C * HW_tp + 4 * B * C * Cr,
        transcendentals=B * (C + Cr),
        bytes_accessed=B * C * HW_tp * itemsize + B * C * 4,
    )
    gate = pl.pallas_call(
        functools.partial(se2d_gate_kernel, hw_true=float(HW)),
        out_shape=jax.ShapeDtypeStruct((B, C, 1), jnp.float32),
        grid=grid,
        in_specs=[
            pl.BlockSpec((bb, C, hw_t), lambda b, h: (b, 0, h)),
            pl.BlockSpec((C, Cr), lambda b, h: (0, 0)),
            pl.BlockSpec((1, Cr), lambda b, h: (0, 0)),
            pl.BlockSpec((Cr, C), lambda b, h: (0, 0)),
            pl.BlockSpec((1, C), lambda b, h: (0, 0)),
        ],
        out_specs=pl.BlockSpec((bb, C, 1), lambda b, h: (b, 0, 0)),
        scratch_shapes=[pltpu.VMEM((bb, C), jnp.float32)],
        compiler_params=pltpu.CompilerParams(
            dimension_semantics=("parallel", "arbitrary"),
            vmem_limit_bytes=vmem_limit,
        ),
        cost_estimate=gate_cost,
    )(x, w1, b1, w2, b2)

    apply_cost = pl.CostEstimate(
        flops=2 * B * C * HW_tp,
        transcendentals=0,
        bytes_accessed=2 * B * C * HW_tp * itemsize + B * C * 4,
    )
    out = pl.pallas_call(
        se2d_apply_kernel,
        out_shape=jax.ShapeDtypeStruct((B, C, HW_tp), x.dtype),
        grid=grid,
        in_specs=[
            pl.BlockSpec((bb, C, hw_t), lambda b, h: (b, 0, h)),
            pl.BlockSpec((bb, C, 1), lambda b, h: (b, 0, 0)),
        ],
        out_specs=pl.BlockSpec((bb, C, hw_t), lambda b, h: (b, 0, h)),
        compiler_params=pltpu.CompilerParams(
            dimension_semantics=("parallel", "parallel"),
            vmem_limit_bytes=vmem_limit,
        ),
        cost_estimate=apply_cost,
    )(x, gate)

    if HW_tp != HW:
        out = out[:, :, :HW]
    return out.reshape(B, C, H, W)


# --------------------------------------------------------------------------
# Reference + test
# --------------------------------------------------------------------------
def se2d_reference(x_nchw, w1, b1, w2, b2):
    x_se = jnp.mean(x_nchw.astype(jnp.float32), axis=(2, 3), keepdims=True)  # (B,C,1,1)
    x_se = jnp.einsum('bcij,cr->brij', x_se, w1) + b1.reshape(1, -1, 1, 1)
    x_se = x_se * jax.nn.sigmoid(x_se)
    x_se = jnp.einsum('brij,rc->bcij', x_se, w2) + b2.reshape(1, -1, 1, 1)
    return (x_nchw.astype(jnp.float32) * jax.nn.sigmoid(x_se)).astype(x_nchw.dtype)


if __name__ == "__main__":
    # SE2D(in_ch=16, se_ratio=0.25, divisor=1) -> reduced_ch = 4
    B, C, H, W = 2, 16, 16, 16
    Cr = int(C * 0.25 / 1)

    key = jax.random.PRNGKey(0)
    kx, k1, k2, k3, k4 = jax.random.split(key, 5)

    x = jax.random.normal(kx, (B, C, H, W), dtype=jnp.float32)

    # conv_reduce: Conv2d(C, Cr, 1) weight (Cr, C, 1, 1) -> stored here as (C, Cr)
    w1 = jax.random.normal(k1, (C, Cr), dtype=jnp.float32) * 0.1
    b1 = jax.random.normal(k2, (1, Cr), dtype=jnp.float32) * 0.1
    # conv_expand: Conv2d(Cr, C, 1) weight (C, Cr, 1, 1) -> stored here as (Cr, C)
    w2 = jax.random.normal(k3, (Cr, C), dtype=jnp.float32) * 0.1
    b2 = jax.random.normal(k4, (1, C), dtype=jnp.float32) * 0.1

    ref = se2d_reference(x, w1, b1, w2, b2)

    # single-phase (auto) path
    out = jax.block_until_ready(se2d_pallas(x, w1, b1, w2, b2))
    assert out.shape == (B, C, H, W)
    assert jnp.allclose(out, ref, atol=1e-5, rtol=1e-5)

    # two-phase (reduce-then-scale) path, forced, to exercise the large-image code
    out2 = jax.block_until_ready(
        se2d_pallas(x, w1, b1, w2, b2, two_phase=True, block_b=1, block_hw=128))
    assert out2.shape == (B, C, H, W)
    assert jnp.allclose(out2, ref, atol=1e-5, rtol=1e-5)

    print("KERNEL_OK")
</pallas_src>

<mosaic_0001>
module attributes {stable_mosaic.version = 11 : i64} {
  func.func @se2d_kernel(%arg0: i32, %arg1: memref<2x16x256xf32, #tpu.memory_space<vmem>>, %arg2: memref<16x4xf32, #tpu.memory_space<vmem>>, %arg3: memref<1x4xf32, #tpu.memory_space<vmem>>, %arg4: memref<4x16xf32, #tpu.memory_space<vmem>>, %arg5: memref<1x16xf32, #tpu.memory_space<vmem>>, %arg6: memref<2x16x256xf32, #tpu.memory_space<vmem>>) attributes {dimension_semantics = [#tpu.dimension_semantics<parallel>], iteration_bounds = array<i64: 1>, scalar_prefetch = 0 : i64, scratch_operands = 0 : i64, tpu.core_type = #tpu.core_type<tc>, window_params = [{transform_indices = @transform_0, window_bounds = array<i64: 2, 16, 256>}, {pipeline_mode = #tpu.pipeline_mode<synchronous>, transform_indices = @transform_1, window_bounds = array<i64: 16, 4>}, {pipeline_mode = #tpu.pipeline_mode<synchronous>, transform_indices = @transform_2, window_bounds = array<i64: 1, 4>}, {pipeline_mode = #tpu.pipeline_mode<synchronous>, transform_indices = @transform_3, window_bounds = array<i64: 4, 16>}, {pipeline_mode = #tpu.pipeline_mode<synchronous>, transform_indices = @transform_4, window_bounds = array<i64: 1, 16>}, {transform_indices = @transform_5, window_bounds = array<i64: 2, 16, 256>}]} {
    %c0 = arith.constant 0 : index
    %c0_0 = arith.constant 0 : index
    %c0_1 = arith.constant 0 : index
    %0 = vector.load %arg1[%c0, %c0_0, %c0_1] : memref<2x16x256xf32, #tpu.memory_space<vmem>>, vector<2x16x256xf32>
    %cst = arith.constant dense<0.000000e+00> : vector<2x16xf32>
    %1 = vector.multi_reduction <add>, %0, %cst [2] : vector<2x16x256xf32> to vector<2x16xf32>
    %cst_2 = arith.constant 3.906250e-03 : f32
    %2 = vector.broadcast %cst_2 : f32 to vector<2x16xf32>
    %3 = arith.mulf %1, %2 : vector<2x16xf32>
    %c0_3 = arith.constant 0 : index
    %c0_4 = arith.constant 0 : index
    %4 = vector.load %arg2[%c0_3, %c0_4] : memref<16x4xf32, #tpu.memory_space<vmem>>, vector<16x4xf32>
    %cst_5 = arith.constant dense<0.000000e+00> : vector<2x4xf32>
    %5 = tpu.matmul %3, %4, %cst_5 {dimension_numbers = #tpu.dot_dimension_numbers<[1], [0], [0], [1], [0, 0, 1, 1], [], []>} : vector<2x16xf32>, vector<16x4xf32>, vector<2x4xf32> -> vector<2x4xf32>
    %c0_6 = arith.constant 0 : index
    %c0_7 = arith.constant 0 : index
    %6 = vector.load %arg3[%c0_6, %c0_7] : memref<1x4xf32, #tpu.memory_space<vmem>>, vector<1x4xf32>
    %7 = vector.broadcast %6 : vector<1x4xf32> to vector<2x4xf32>
    %8 = arith.addf %5, %7 : vector<2x4xf32>
    %9 = arith.negf %8 : vector<2x4xf32>
    %10 = math.exp %9 : vector<2x4xf32>
    %cst_8 = arith.constant 1.000000e+00 : f32
    %11 = vector.broadcast %cst_8 : f32 to vector<2x4xf32>
    %12 = arith.addf %11, %10 : vector<2x4xf32>
    %13 = arith.divf %11, %12 : vector<2x4xf32>
    %14 = arith.mulf %8, %13 : vector<2x4xf32>
    %c0_9 = arith.constant 0 : index
    %c0_10 = arith.constant 0 : index
    %15 = vector.load %arg4[%c0_9, %c0_10] : memref<4x16xf32, #tpu.memory_space<vmem>>, vector<4x16xf32>
    %cst_11 = arith.constant dense<0.000000e+00> : vector<2x16xf32>
    %16 = tpu.matmul %14, %15, %cst_11 {dimension_numbers = #tpu.dot_dimension_numbers<[1], [0], [0], [1], [0, 0, 1, 1], [], []>} : vector<2x4xf32>, vector<4x16xf32>, vector<2x16xf32> -> vector<2x16xf32>
    %c0_12 = arith.constant 0 : index
    %c0_13 = arith.constant 0 : index
    %17 = vector.load %arg5[%c0_12, %c0_13] : memref<1x16xf32, #tpu.memory_space<vmem>>, vector<1x16xf32>
    %18 = vector.broadcast %17 : vector<1x16xf32> to vector<2x16xf32>
    %19 = arith.addf %16, %18 : vector<2x16xf32>
    %20 = arith.negf %19 : vector<2x16xf32>
    %21 = math.exp %20 : vector<2x16xf32>
    %cst_14 = arith.constant 1.000000e+00 : f32
    %22 = vector.broadcast %cst_14 : f32 to vector<2x16xf32>
    %23 = arith.addf %22, %21 : vector<2x16xf32>
    %24 = arith.divf %22, %23 : vector<2x16xf32>
    %c0_15 = arith.constant 0 : index
    %c0_16 = arith.constant 0 : index
    %c0_17 = arith.constant 0 : index
    %25 = vector.load %arg1[%c0_15, %c0_16, %c0_17] : memref<2x16x256xf32, #tpu.memory_space<vmem>>, vector<2x16x256xf32>
    %26 = vector.shape_cast %24 : vector<2x16xf32> to vector<2x16x1xf32>
    %27 = vector.broadcast %26 : vector<2x16x1xf32> to vector<2x16x256xf32>
    %28 = arith.mulf %25, %27 : vector<2x16x256xf32>
    %c0_18 = arith.constant 0 : index
    %c0_19 = arith.constant 0 : index
    %c0_20 = arith.constant 0 : index
    %29 = vector.load %arg6[%c0_18, %c0_19, %c0_20] : memref<2x16x256xf32, #tpu.memory_space<vmem>>, vector<2x16x256xf32>
    tpu.vector_store %arg6[%c0_18, %c0_19, %c0_20], %28 {strides = array<i32>} : memref<2x16x256xf32, #tpu.memory_space<vmem>>, vector<2x16x256xf32>,
    return
  }
  func.func @transform_0(%arg0: i32) -> (i32, i32, i32) {
    %c0_i32 = arith.constant 0 : i32
    %c0_i32_0 = arith.constant 0 : i32
    %c0_i32_1 = arith.constant 0 : i32
    return %arg0, %c0_i32, %c0_i32_0 : i32, i32, i32
  }
  func.func @transform_1(%arg0: i32) -> (i32, i32) {
    %c0_i32 = arith.constant 0 : i32
    %c0_i32_0 = arith.constant 0 : i32
    %c0_i32_1 = arith.constant 0 : i32
    return %c0_i32, %c0_i32_0 : i32, i32
  }
  func.func @transform_2(%arg0: i32) -> (i32, i32) {
    %c0_i32 = arith.constant 0 : i32
    %c0_i32_0 = arith.constant 0 : i32
    %c0_i32_1 = arith.constant 0 : i32
    return %c0_i32, %c0_i32_0 : i32, i32
  }
  func.func @transform_3(%arg0: i32) -> (i32, i32) {
    %c0_i32 = arith.constant 0 : i32
    %c0_i32_0 = arith.constant 0 : i32
    %c0_i32_1 = arith.constant 0 : i32
    return %c0_i32, %c0_i32_0 : i32, i32
  }
  func.func @transform_4(%arg0: i32) -> (i32, i32) {
    %c0_i32 = arith.constant 0 : i32
    %c0_i32_0 = arith.constant 0 : i32
    %c0_i32_1 = arith.constant 0 : i32
    return %c0_i32, %c0_i32_0 : i32, i32
  }
  func.func @transform_5(%arg0: i32) -> (i32, i32, i32) {
    %c0_i32 = arith.constant 0 : i32
    %c0_i32_0 = arith.constant 0 : i32
    %c0_i32_1 = arith.constant 0 : i32
    return %arg0, %c0_i32, %c0_i32_0 : i32, i32, i32
  }
}

</mosaic_0001>

<llo_original>
// kernel: tpu_custom_call.1
$region0: #{tpu_custom_call.1}
  #allocation0 [shape = 'u32[]', space=smem, size = 0x4, offset = 0x4, fixed_abs, tag = 'smem constant byte address 0x4 - core index']
  #allocation1 [shape = 'u32[144,128]{1,0:T(1,128)}', space=vmem, size = 0x12000, scoped, tag = 'internal scratch']
  %s0 = inlined_call_operand.hbm [shape: f32[2,16,256], index: 0, kind: input, shape index: {}]
  %s1 = inlined_call_operand.hbm [shape: f32[16,4], index: 1, kind: input, shape index: {}]
  %s2 = inlined_call_operand.hbm [shape: f32[1,4], index: 2, kind: input, shape index: {}]
  %s3 = inlined_call_operand.hbm [shape: f32[4,16], index: 3, kind: input, shape index: {}]
  %s4 = inlined_call_operand.hbm [shape: f32[1,16], index: 4, kind: input, shape index: {}]
  %s5 = inlined_call_operand.hbm [shape: f32[2,16,256], index: 5, kind: output, shape index: {}]
  %s6 = sld [smem:[#allocation0]]
  $region50: #{tpu_custom_call.1} parent=0
    _
  %s8 = ssub.s32 1, %s6
  %s9 = scalar_select 0, %s8, %s6
  $region1: #{tpu_custom_call.1} parent=0
    #allocation2 [shape = 'u8[32768]{0}', space=vmem, size = 0x8000, scoped, tag = 'input window, operand 0, single buffered']
    #allocation3 [shape = 's32[1]{0}', space=sflag, size = 0x4, scoped, tag = 'scoped memory for tpu_custom_call.1']
    #allocation4 [shape = 's32[1]{0}', space=sflag, size = 0x4, scoped, tag = 'scoped memory for tpu_custom_call.1']
    #allocation5 [shape = 'u8[8192]{0}', space=vmem, size = 0x2000, scoped, tag = 'input window, operand 1, single buffered']
    #allocation6 [shape = 's32[1]{0}', space=sflag, size = 0x4, scoped, tag = 'scoped memory for tpu_custom_call.1']
    #allocation7 [shape = 'u8[512]{0}', space=vmem, size = 0x400, scoped, tag = 'input window, operand 2, single buffered']
    #allocation8 [shape = 'u8[2048]{0}', space=vmem, size = 0x800, scoped, tag = 'input window, operand 3, single buffered']
    #allocation9 [shape = 's32[1]{0}', space=sflag, size = 0x4, scoped, tag = 'scoped memory for tpu_custom_call.1']
    #allocation10 [shape = 'u8[512]{0}', space=vmem, size = 0x400, scoped, tag = 'input window, operand 4, single buffered']
    #allocation11 [shape = 'u8[32768]{0}', space=vmem, size = 0x8000, scoped, tag = 'output window, operand 0, single buffered']
    %10 = vsyncpa [#allocation3], 0
    %11 = vsyncpa [#allocation6], 0
    %12 = vsyncpa [#allocation9], 0
    %13 = vsyncpa [#allocation4], 0
    // Predicated region
    $region2: #{tpu_custom_call.1} parent=1 // pred_check
      _
    $region3: #{tpu_custom_call.1} parent=1 // pred_check_branch
      %15 = sbr.rel (0) target = $region5
    $region4: #{tpu_custom_call.1} parent=1 // pred_region
      %s17 = ssub.s32 1024, 1024
      %18 = vsyncadd [#allocation3], %s17
      %s19 = sshll.u32 [#allocation2], 4
      %s20 = int_to_ptr.vmem [resolvable:$true] %s19
      %25 = dma.hbm_to_vmem [thread:$0]  %s0, 1024, %s20, [#allocation3], 256, 256, 16
    $region5: #{tpu_custom_call.1} parent=1 // pred_fallthru
      _
    // Predicated region
    $region6: #{tpu_custom_call.1} parent=1 // pred_check
      _
    $region7: #{tpu_custom_call.1} parent=1 // pred_check_branch
      %27 = sbr.rel (0) target = $region9
    $region8: #{tpu_custom_call.1} parent=1 // pred_region
      %s29 = ssub.s32 256, 256
      %30 = vsyncadd [#allocation6], %s29
      %s31 = sshll.u32 [#allocation5], 4
      %s32 = int_to_ptr.vmem [resolvable:$true] %s31
      %37 = dma.hbm_to_vmem [thread:$0]  %s1, 256, %s32, [#allocation6], 128, 128, 8
    $region9: #{tpu_custom_call.1} parent=1 // pred_fallthru
      _
    // Predicated region
    $region10: #{tpu_custom_call.1} parent=1 // pred_check
      _
    $region11: #{tpu_custom_call.1} parent=1 // pred_check_branch
      %39 = sbr.rel (0) target = $region13
    $region12: #{tpu_custom_call.1} parent=1 // pred_region
      %s41 = ssub.s32 16, 16
      %42 = vsyncadd [#allocation6], %s41
      %s44 = sshll.u32 [#allocation7], 4
      %s45 = int_to_ptr.vmem [resolvable:$true] %s44
      %47 = dma.hbm_to_vmem [thread:$0]  %s2, 16, %s45, [#allocation6]
    $region13: #{tpu_custom_call.1} parent=1 // pred_fallthru
      _
    // Predicated region
    $region14: #{tpu_custom_call.1} parent=1 // pred_check
      _
    $region15: #{tpu_custom_call.1} parent=1 // pred_check_branch
      %49 = sbr.rel (0) target = $region17
    $region16: #{tpu_custom_call.1} parent=1 // pred_region
      %s51 = ssub.s32 64, 64
      %52 = vsyncadd [#allocation9], %s51
      %s54 = sshll.u32 [#allocation8], 4
      %s55 = int_to_ptr.vmem [resolvable:$true] %s54
      %57 = dma.hbm_to_vmem [thread:$0]  %s3, 64, %s55, [#allocation9]
    $region17: #{tpu_custom_call.1} parent=1 // pred_fallthru
      _
    // Predicated region
    $region18: #{tpu_custom_call.1} parent=1 // pred_check
      _
    $region19: #{tpu_custom_call.1} parent=1 // pred_check_branch
      %59 = sbr.rel (0) target = $region21
    $region20: #{tpu_custom_call.1} parent=1 // pred_region
      %s61 = ssub.s32 16, 16
      %62 = vsyncadd [#allocation9], %s61
      %s64 = sshll.u32 [#allocation10], 4
      %s65 = int_to_ptr.vmem [resolvable:$true] %s64
      %67 = dma.hbm_to_vmem [thread:$0]  %s4, 16, %s65, [#allocation9]
    $region21: #{tpu_custom_call.1} parent=1 // pred_fallthru
      _
    // Predicated region
    $region22: #{tpu_custom_call.1} parent=1 // pred_check
      _
    $region23: #{tpu_custom_call.1} parent=1 // pred_check_branch
      %69 = sbr.rel (0) target = $region25
    $region24: #{tpu_custom_call.1} parent=1 // pred_region
      %70 = dma.done [#allocation3], 1024
    $region25: #{tpu_custom_call.1} parent=1 // pred_fallthru
      _
    // Predicated region
    $region26: #{tpu_custom_call.1} parent=1 // pred_check
      _
    $region27: #{tpu_custom_call.1} parent=1 // pred_check_branch
      %72 = sbr.rel (0) target = $region29
    $region28: #{tpu_custom_call.1} parent=1 // pred_region
      %73 = dma.done [#allocation6], 256
    $region29: #{tpu_custom_call.1} parent=1 // pred_fallthru
      _
    // Predicated region
    $region30: #{tpu_custom_call.1} parent=1 // pred_check
      _
    $region31: #{tpu_custom_call.1} parent=1 // pred_check_branch
      %75 = sbr.rel (0) target = $region33
    $region32: #{tpu_custom_call.1} parent=1 // pred_region
      %76 = dma.done [#allocation6], 16
    $region33: #{tpu_custom_call.1} parent=1 // pred_fallthru
      _
    // Predicated region
    $region34: #{tpu_custom_call.1} parent=1 // pred_check
      _
    $region35: #{tpu_custom_call.1} parent=1 // pred_check_branch
      %78 = sbr.rel (0) target = $region37
    $region36: #{tpu_custom_call.1} parent=1 // pred_region
      %79 = dma.done [#allocation9], 64
    $region37: #{tpu_custom_call.1} parent=1 // pred_fallthru
      _
    // Predicated region
    $region38: #{tpu_custom_call.1} parent=1 // pred_check
      _
    $region39: #{tpu_custom_call.1} parent=1 // pred_check_branch
      %81 = sbr.rel (0) target = $region41
    $region40: #{tpu_custom_call.1} parent=1 // pred_region
      %82 = dma.done [#allocation9], 16
    $region41: #{tpu_custom_call.1} parent=1 // pred_fallthru
      _
    %v83 = vld [vmem:[#allocation2] sm:$0xff]
    %v84 = vld [vmem:[#allocation2 + $0x8] sm:$0xff]
    %v85 = vld [vmem:[#allocation2 + $0x10] sm:$0xff]
    %v86 = vld [vmem:[#allocation2 + $0x18] sm:$0xff]
    %v87 = vld [vmem:[#allocation2 + $0x20] sm:$0xff]
    %v88 = vld [vmem:[#allocation2 + $0x28] sm:$0xff]
    %v89 = vld [vmem:[#allocation2 + $0x30] sm:$0xff]
    %v90 = vld [vmem:[#allocation2 + $0x38] sm:$0xff]
    %v91 = vadd.f32 %v83, %v84
    %92 = vadd.xlane.f32.xlu0 %v91
    %v93 = vpop.xlane.xlu0 %92
    %v94 = vadd.f32 %v85, %v86
    %95 = vadd.xlane.f32.xlu0 %v94
    %v96 = vpop.xlane.xlu0 %95
    %v97 = vadd.f32 %v87, %v88
    %98 = vadd.xlane.f32.xlu0 %v97
    %v99 = vpop.xlane.xlu0 %98
    %v100 = vadd.f32 %v89, %v90
    %101 = vadd.xlane.f32.xlu0 %v100
    %v102 = vpop.xlane.xlu0 %101
    %v103 = vmul.f32 %v93, 0.00390625
    %v104 = vmul.f32 %v96, 0.00390625
    %v105 = vmul.f32 %v99, 0.00390625
    %v106 = vmul.f32 %v102, 0.00390625
    %v107 = vld [vmem:[#allocation5] sm:$0xff]
    %v108 = vld [vmem:[#allocation5 + $0x8] sm:$0xff]
    %v109 = vld [vmem:[#allocation7] sm:$0x1]
    %v111 = vlaneseq
    %v112 = vshrl.u32 %v111, 7
    %v113 = vsub.s32 0, %v112
    %v114 = vrot.slane %v109, %v113
    %v120 = vlaneseq
    %v121 = vand.u32 %v120, 127
    %v122 = vlaneseq
    %v123 = vshrl.u32 %v122, 7
    %v124 = vsub.s32 %v121, %v123
    %v125 = vrot.slane %v103, %v124
    %v126 = vadd.s32 %v121, 4294967288
    %v127 = vlaneseq
    %v128 = vshrl.u32 %v127, 7
    %v129 = vsub.s32 %v126, %v128
    %v130 = vrot.slane %v104, %v129
    %vm131 = vcmask 130112
    %v132 = vsel %vm131, %v130, %v125
    %v133 = vlaneseq
    %v134 = vshrl.u32 %v133, 7
    %v135 = vsub.s32 %v121, %v134
    %v136 = vrot.slane %v105, %v135
    %v137 = vlaneseq
    %v138 = vshrl.u32 %v137, 7
    %v139 = vsub.s32 %v126, %v138
    %v140 = vrot.slane %v106, %v139
    %v141 = vsel %vm131, %v140, %v136
    %vm142 = vcmask 1041409
    %v143 = vsel %vm142, %v141, %v132
    %vm144 = vcmask 130048
    %v145 = vsel %vm144, %v143, 0
    %147 = vmatprep.subr.mxu0 0.0
    %148 = vmatpush1.msra.mxu0 %v107
    %149 = vmatprep.subr.mxu0 0.0
    %150 = vmatpush1.msra.mxu0 %v108
    %151 = vmatprep.subr.mxu0 0.0
    %152 = vmatpush1.msra.mxu0 0.0
    %153 = vmatprep.subr.mxu0 0.0
    %154 = vmatpush1.msra.mxu0 0.0
    %155 = vmatprep.subr.mxu0 0.0
    %156 = vmatpush1.msra.mxu0 0.0
    %157 = vmatprep.subr.mxu0 0.0
    %158 = vmatpush1.msra.mxu0 0.0
    %159 = vmatprep.subr.mxu0 0.0
    %160 = vmatpush1.msra.mxu0 0.0
    %161 = vmatprep.subr.mxu0 0.0
    %162 = vmatpush1.msra.mxu0 0.0
    %163 = vmatprep.subr.mxu0 0.0
    %164 = vmatpush1.msra.mxu0 0.0
    %165 = vmatprep.subr.mxu0 0.0
    %166 = vmatpush1.msra.mxu0 0.0
    %167 = vmatprep.subr.mxu0 0.0
    %168 = vmatpush1.msra.mxu0 0.0
    %169 = vmatprep.subr.mxu0 0.0
    %170 = vmatpush1.msra.mxu0 0.0
    %171 = vmatprep.subr.mxu0 0.0
    %172 = vmatpush1.msra.mxu0 0.0
    %173 = vmatprep.subr.mxu0 0.0
    %174 = vmatpush1.msra.mxu0 0.0
    %175 = vmatprep.subr.mxu0 0.0
    %176 = vmatpush1.msra.mxu0 0.0
    %177 = vmatprep.subr.mxu0 0.0
    %178 = vmatpush1.msra.mxu0 0.0
    %179 = vmatprep.subr.mxu0 0.0
    %180 = vmatpush1.msra.mxu0 0.0
    %181 = vmatprep.subr.mxu0 0.0
    %182 = vmatpush1.msra.mxu0 0.0
    %183 = vmatprep.subr.mxu0 0.0
    %184 = vmatpush1.msra.mxu0 0.0
    %185 = vmatprep.subr.mxu0 0.0
    %186 = vmatpush1.msra.mxu0 0.0
    %187 = vmatprep.subr.mxu0 0.0
    %188 = vmatpush1.msra.mxu0 0.0
    %189 = vmatprep.subr.mxu0 0.0
    %190 = vmatpush1.msra.mxu0 0.0
    %191 = vmatprep.subr.mxu0 0.0
    %192 = vmatpush1.msra.mxu0 0.0
    %193 = vmatprep.subr.mxu0 0.0
    %194 = vmatpush1.msra.mxu0 0.0
    %195 = vmatprep.subr.mxu0 0.0
    %196 = vmatpush1.msra.mxu0 0.0
    %197 = vmatprep.subr.mxu0 0.0
    %198 = vmatpush1.msra.mxu0 0.0
    %199 = vmatprep.subr.mxu0 0.0
    %200 = vmatpush1.msra.mxu0 0.0
    %201 = vmatprep.subr.mxu0 0.0
    %202 = vmatpush1.msra.mxu0 0.0
    %203 = vmatprep.subr.mxu0 0.0
    %204 = vmatpush1.msra.mxu0 0.0
    %205 = vmatprep.subr.mxu0 0.0
    %206 = vmatpush1.msra.mxu0 0.0
    %207 = vmatprep.subr.mxu0 0.0
    %208 = vmatpush1.msra.mxu0 0.0
    %209 = vmatprep.subr.mxu0 0.0
    %210 = vmatpush1.msra.mxu0 0.0
    %211 = vmatprep.mubr.f32.mxu0 0.0
    %212 = vmatmul.mubr.f32.gmra.mrb[0].mxu0 %v145
    %v213 = vpop.f32.mrb[0].mxu0
    %v214 = vadd.f32 %v114, %v213
    %v215 = vpop.f32.mrb[0].mxu0
    %216 = vdwg.mxu0
    %v217 = vxor.u32 %v214, 2147483648
    %v218 = vmul.f32 %v217, 1.442695
    %v219 = vpow.pop %v218
    %v220 = vadd.f32 %v219, 1.0
    %v221 = vrcp.pop %v220
    %v222 = vmul.f32 1.0, %v221
    %v223 = vmul.f32 %v214, %v222
    %v224 = vld [vmem:[#allocation8] sm:$0xf]
    %v225 = vld [vmem:[#allocation10] sm:$0x1]
    %v227 = vlaneseq
    %v228 = vshrl.u32 %v227, 7
    %v229 = vsub.s32 0, %v228
    %v230 = vrot.slane %v225, %v229
    %vm232 = vcmask 31744
    %v234 = vsel %vm232, %v223, 0
    %vm236 = vcmask 1043456
    %v238 = vsel %vm236, %v224, 0
    %240 = vmatprep.subr.mxu0 0.0
    %241 = vmatpush1.msra.mxu0 %v238
    %242 = vmatprep.subr.mxu0 0.0
    %243 = vmatpush1.msra.mxu0 0.0
    %244 = vmatprep.subr.mxu0 0.0
    %245 = vmatpush1.msra.mxu0 0.0
    %246 = vmatprep.subr.mxu0 0.0
    %247 = vmatpush1.msra.mxu0 0.0
    %248 = vmatprep.subr.mxu0 0.0
    %249 = vmatpush1.msra.mxu0 0.0
    %250 = vmatprep.subr.mxu0 0.0
    %251 = vmatpush1.msra.mxu0 0.0
    %252 = vmatprep.subr.mxu0 0.0
    %253 = vmatpush1.msra.mxu0 0.0
    %254 = vmatprep.subr.mxu0 0.0
    %255 = vmatpush1.msra.mxu0 0.0
    %256 = vmatprep.subr.mxu0 0.0
    %257 = vmatpush1.msra.mxu0 0.0
    %258 = vmatprep.subr.mxu0 0.0
    %259 = vmatpush1.msra.mxu0 0.0
    %260 = vmatprep.subr.mxu0 0.0
    %261 = vmatpush1.msra.mxu0 0.0
    %262 = vmatprep.subr.mxu0 0.0
    %263 = vmatpush1.msra.mxu0 0.0
    %264 = vmatprep.subr.mxu0 0.0
    %265 = vmatpush1.msra.mxu0 0.0
    %266 = vmatprep.subr.mxu0 0.0
    %267 = vmatpush1.msra.mxu0 0.0
    %268 = vmatprep.subr.mxu0 0.0
    %269 = vmatpush1.msra.mxu0 0.0
    %270 = vmatprep.subr.mxu0 0.0
    %271 = vmatpush1.msra.mxu0 0.0
    %272 = vmatprep.subr.mxu0 0.0
    %273 = vmatpush1.msra.mxu0 0.0
    %274 = vmatprep.subr.mxu0 0.0
    %275 = vmatpush1.msra.mxu0 0.0
    %276 = vmatprep.subr.mxu0 0.0
    %277 = vmatpush1.msra.mxu0 0.0
    %278 = vmatprep.subr.mxu0 0.0
    %279 = vmatpush1.msra.mxu0 0.0
    %280 = vmatprep.subr.mxu0 0.0
    %281 = vmatpush1.msra.mxu0 0.0
    %282 = vmatprep.subr.mxu0 0.0
    %283 = vmatpush1.msra.mxu0 0.0
    %284 = vmatprep.subr.mxu0 0.0
    %285 = vmatpush1.msra.mxu0 0.0
    %286 = vmatprep.subr.mxu0 0.0
    %287 = vmatpush1.msra.mxu0 0.0
    %288 = vmatprep.subr.mxu0 0.0
    %289 = vmatpush1.msra.mxu0 0.0
    %290 = vmatprep.subr.mxu0 0.0
    %291 = vmatpush1.msra.mxu0 0.0
    %292 = vmatprep.subr.mxu0 0.0
    %293 = vmatpush1.msra.mxu0 0.0
    %294 = vmatprep.subr.mxu0 0.0
    %295 = vmatpush1.msra.mxu0 0.0
    %296 = vmatprep.subr.mxu0 0.0
    %297 = vmatpush1.msra.mxu0 0.0
    %298 = vmatprep.subr.mxu0 0.0
    %299 = vmatpush1.msra.mxu0 0.0
    %300 = vmatprep.subr.mxu0 0.0
    %301 = vmatpush1.msra.mxu0 0.0
    %302 = vmatprep.subr.mxu0 0.0
    %303 = vmatpush1.msra.mxu0 0.0
    %304 = vmatprep.mubr.f32.mxu0 0.0
    %305 = vmatmul.mubr.f32.gmra.mrb[0].mxu0 %v234
    %v306 = vpop.f32.mrb[0].mxu0
    %v307 = vadd.f32 %v230, %v306
    %v308 = vpop.f32.mrb[0].mxu0
    %309 = vdwg.mxu0
    %v310 = vxor.u32 %v307, 2147483648
    %v311 = vmul.f32 %v310, 1.442695
    %v312 = vpow.pop %v311
    %v313 = vadd.f32 %v312, 1.0
    %v314 = vrcp.pop %v313
    %v315 = vmul.f32 1.0, %v314
    %v316 = vlaneseq
    %v317 = vshrl.u32 %v316, 7
    %v318 = vsub.s32 0, %v317
    %v319 = vrot.slane %v315, %v318
    %321 = vbcast.lane.b32.xlu0 %v319, 256
    %v322 = vpop.permute.xlu0 %321
    %s324 = sor.u32 256, 8
    %325 = vbcast.lane.b32.xlu0 %v319, %s324
    %v326 = vpop.permute.xlu0 %325
    %v327 = vlaneseq
    %v328 = vshrl.u32 %v327, 7
    %v329 = vsub.s32 1, %v328
    %v330 = vrot.slane %v315, %v329
    %332 = vbcast.lane.b32.xlu0 %v330, 256
    %v333 = vpop.permute.xlu0 %332
    %s335 = sor.u32 256, 8
    %336 = vbcast.lane.b32.xlu0 %v330, %s335
    %v337 = vpop.permute.xlu0 %336
    %v338 = vmul.f32 %v83, %v322
    %v339 = vmul.f32 %v84, %v322
    %v340 = vmul.f32 %v85, %v326
    %v341 = vmul.f32 %v86, %v326
    %v342 = vmul.f32 %v87, %v333
    %v343 = vmul.f32 %v88, %v333
    %v344 = vmul.f32 %v89, %v337
    %v345 = vmul.f32 %v90, %v337
    %346 = vst [vmem:[#allocation11] sm:$0xff] %v338
    %347 = vst [vmem:[#allocation11 + $0x8] sm:$0xff] %v339
    %348 = vst [vmem:[#allocation11 + $0x10] sm:$0xff] %v340
    %349 = vst [vmem:[#allocation11 + $0x18] sm:$0xff] %v341
    %350 = vst [vmem:[#allocation11 + $0x20] sm:$0xff] %v342
    %351 = vst [vmem:[#allocation11 + $0x28] sm:$0xff] %v343
    %352 = vst [vmem:[#allocation11 + $0x30] sm:$0xff] %v344
    %353 = vst [vmem:[#allocation11 + $0x38] sm:$0xff] %v345
    // Predicated region
    $region42: #{tpu_custom_call.1} parent=1 // pred_check
      _
    $region43: #{tpu_custom_call.1} parent=1 // pred_check_branch
      %355 = sbr.rel (0) target = $region45
    $region44: #{tpu_custom_call.1} parent=1 // pred_region
      %s357 = ssub.s32 1024, 1024
      %358 = vsyncadd [#allocation4], %s357
      %s359 = sshll.u32 [#allocation11], 4
      %s360 = int_to_ptr.vmem [resolvable:$true] %s359
      %365 = dma.vmem_to_hbm [thread:$0]  %s360, 1024, %s5, [#allocation4], 256, 256, 16
    $region45: #{tpu_custom_call.1} parent=1 // pred_fallthru
      _
    // Predicated region
    $region46: #{tpu_custom_call.1} parent=1 // pred_check
      _
    $region47: #{tpu_custom_call.1} parent=1 // pred_check_branch
      %367 = sbr.rel (0) target = $region49
    $region48: #{tpu_custom_call.1} parent=1 // pred_region
      %368 = dma.done [#allocation4], 1024
    $region49: #{tpu_custom_call.1} parent=1 // pred_fallthru
      _
    %369 = vsyncpa [#allocation3], 1
    %370 = vsyncpa [#allocation6], 1
    %371 = vsyncpa [#allocation9], 1
    %372 = vsyncpa [#allocation4], 1

</llo_original>
